<compile_context>
chip_gen: v6e
topology: v6e:2x2x1
jax: 0.10.0
libtpu: 0.0.40
codegen_flags: <defaults>
</compile_context>

<pallas_src>
import functools
import math

import jax
import jax.numpy as jnp
from jax import lax
from jax.experimental import pallas as pl
from jax.experimental.pallas import tpu as pltpu

_INV_SQRT2 = 1.0 / math.sqrt(2.0)


def _gelu_exact(x):
    # PyTorch F.gelu default (approximate='none'): 0.5 * x * (1 + erf(x/sqrt(2)))
    return 0.5 * x * (1.0 + lax.erf(x * _INV_SQRT2))


def _softplus(x):
    # Numerically stable softplus: max(x, 0) + log1p(exp(-|x|))
    return jnp.maximum(x, 0.0) + jnp.log1p(jnp.exp(-jnp.abs(x)))


def _round_up(x, m):
    return (x + m - 1) // m * m


def _vmem_capacity_bytes():
    try:
        return int(pltpu.get_tpu_info().vmem_capacity_bytes)
    except Exception:
        return 64 * 1024 * 1024  # conservative (v7x per-TC VMEM)


# ----------------------------------------------------------------------------
# Kernels
# ----------------------------------------------------------------------------
def _ffn_kernel_streamed(mu_ref, var_ref,
                         w1m_ref, b1m_ref, w1v_ref, b1v_ref,
                         w2m_ref, b2m_ref, w2v_ref, b2v_ref,
                         mu_out_ref, var_out_ref):
    """Grid = (row_tiles, d_ff_tiles). Second-matmul partials accumulate
    directly into the VMEM-resident f32 output blocks; b2 is folded into the
    k==0 init and the var-path softplus is applied in place on the last k."""
    k = pl.program_id(1)
    w_dtype = w1m_ref.dtype

    @pl.when(k == 0)
    def _init():
        mu_out_ref[...] = jnp.broadcast_to(b2m_ref[...], mu_out_ref.shape)
        var_out_ref[...] = jnp.broadcast_to(b2v_ref[...], var_out_ref.shape)

    # mu path: Linear -> GELU -> partial Linear (accumulated over d_ff tiles)
    m1 = _gelu_exact(
        jnp.dot(mu_ref[...], w1m_ref[...], preferred_element_type=jnp.float32)
        + b1m_ref[...])
    mu_out_ref[...] += jnp.dot(m1.astype(w_dtype), w2m_ref[...],
                               preferred_element_type=jnp.float32)

    # var path: Linear -> softplus -> partial Linear
    v1 = _softplus(
        jnp.dot(var_ref[...], w1v_ref[...], preferred_element_type=jnp.float32)
        + b1v_ref[...])
    var_out_ref[...] += jnp.dot(v1.astype(w_dtype), w2v_ref[...],
                                preferred_element_type=jnp.float32)

    @pl.when(k == pl.num_programs(1) - 1)
    def _finalize():
        var_out_ref[...] = _softplus(var_out_ref[...])


def _ffn_kernel_resident(mu_ref, var_ref,
                         w1m_ref, b1m_ref, w1v_ref, b1v_ref,
                         w2m_ref, b2m_ref, w2v_ref, b2v_ref,
                         mu_out_ref, var_out_ref):
    """Grid = (row_tiles,). All weights are fully VMEM-resident (constant
    index maps, single-buffered) -> they are DMA'd from HBM once per
    pallas_call instead of once per row tile."""
    w_dtype = w1m_ref.dtype

    m1 = _gelu_exact(
        jnp.dot(mu_ref[...], w1m_ref[...], preferred_element_type=jnp.float32)
        + b1m_ref[...])
    mu_out_ref[...] = (jnp.dot(m1.astype(w_dtype), w2m_ref[...],
                               preferred_element_type=jnp.float32)
                       + b2m_ref[...]).astype(mu_out_ref.dtype)

    v1 = _softplus(
        jnp.dot(var_ref[...], w1v_ref[...], preferred_element_type=jnp.float32)
        + b1v_ref[...])
    var_out_ref[...] = _softplus(
        jnp.dot(v1.astype(w_dtype), w2v_ref[...],
                preferred_element_type=jnp.float32)
        + b2v_ref[...]).astype(var_out_ref.dtype)


# ----------------------------------------------------------------------------
# Wrapper
# ----------------------------------------------------------------------------
@functools.partial(jax.jit, static_argnames=("row_tile", "ff_tile",
                                             "weight_dtype", "act_dtype"))
def dist_feed_forward(mu, var, params, row_tile=None, ff_tile=512,
                      weight_dtype=jnp.bfloat16, act_dtype=jnp.bfloat16):
    """mu, var: (batch, seq, d_model). Returns (mu_out, var_out) same shape.

    Weights in `params` are (in_features, out_features); biases are (1, out)."""
    batch, seq, d_model = mu.shape
    d_ff = params["w1m"].shape[1]
    N = batch * seq
    f32 = jnp.float32
    wbytes = jnp.dtype(weight_dtype).itemsize
    abytes = jnp.dtype(act_dtype).itemsize

    # --- per-generation VMEM budget (leave headroom: never claim 100% of v7x).
    vmem_cap = _vmem_capacity_bytes()
    vmem_limit = max(32 * 1024 * 1024,
                     min(int(vmem_cap * 0.85), vmem_cap - 8 * 1024 * 1024,
                         128 * 1024 * 1024))
    vmem_budget = int(vmem_limit * 0.75)  # room for pipelining/compiler scratch

    # --- lane-dense padded feature dims (multiples of 128).
    d_model_p = _round_up(d_model, 128)
    d_ff_128 = _round_up(d_ff, 128)

    # --- ff-axis tile: multiple of 128, prefer large tiles; for awkward d_ff
    # pad up (zero padding is exact) rather than collapsing the tile to 128.
    cap_u = max(1, min(ff_tile, d_ff_128) // 128)
    m_u = d_ff_128 // 128
    best_t, best_score = 1, None
    for t in range(1, cap_u + 1):
        steps = -(-m_u // t)
        padded = steps * t
        score = padded * (1.0 + 0.05 * steps)  # padded MXU work + step overhead
        if best_score is None or score < best_score:
            best_score, best_t = score, t
    ft = best_t * 128
    d_ff_p = _round_up(d_ff_128, ft)

    # --- row tile: weight-streaming arithmetic intensity ~ rt FLOP/byte, so go
    # as big as the VMEM budget allows (bigger on 128 MiB v5e/v6e than on v7x).
    if row_tile is None:
        row_tile = 1024 if vmem_cap >= 96 * 1024 * 1024 else 512
    rt = _round_up(min(row_tile, _round_up(N, 8)), 8)

    bias_bytes = 2 * (d_ff_p + d_model_p) * 4
    resident_weight_bytes = 4 * d_model_p * d_ff_p * wbytes + bias_bytes

    def resident_vmem(rt_):
        return (resident_weight_bytes
                + 2 * rt_ * d_model_p * abytes * 2   # mu/var tiles (dbl-buffered)
                + 2 * rt_ * d_model_p * 4 * 2        # f32 output tiles
                + 2 * rt_ * d_ff_p * 4)              # transient intermediates

    def streamed_vmem(rt_):
        return (4 * d_model_p * ft * wbytes * 2      # weight tiles (dbl-buffered)
                + bias_bytes
                + 2 * rt_ * d_model_p * abytes * 2
                + 2 * rt_ * d_model_p * 4 * 2
                + 2 * rt_ * ft * 4)

    use_resident = resident_vmem(rt) <= vmem_budget
    if not use_resident:
        # Shrink the ff tile first (keeps rt, i.e. arithmetic intensity, high),
        # then the row tile, until the streamed working set fits.
        while streamed_vmem(rt) > vmem_budget:
            if ft > 128 and ft % 256 == 0:
                ft //= 2
            elif rt > 64:
                rt = max(64, _round_up(rt // 2, 8))
            else:
                break
    N_p = _round_up(N, rt)

    def pad2(x, rows, cols, dtype):
        x = x.astype(dtype)
        r, c = x.shape
        if r == rows and c == cols:
            return x
        return jnp.pad(x, ((0, rows - r), (0, cols - c)))

    # Zero padding is exact: padded d_ff columns of W1*/b1* are 0 and the
    # corresponding rows of W2* are 0; padded rows/lanes are sliced off.
    mu2 = pad2(mu.reshape(N, d_model), N_p, d_model_p, act_dtype)
    var2 = pad2(var.reshape(N, d_model), N_p, d_model_p, act_dtype)

    w1m = pad2(params["w1m"], d_model_p, d_ff_p, weight_dtype)
    w1v = pad2(params["w1v"], d_model_p, d_ff_p, weight_dtype)
    w2m = pad2(params["w2m"], d_ff_p, d_model_p, weight_dtype)
    w2v = pad2(params["w2v"], d_ff_p, d_model_p, weight_dtype)
    b1m = pad2(params["b1m"], 1, d_ff_p, f32)
    b1v = pad2(params["b1v"], 1, d_ff_p, f32)
    b2m = pad2(params["b2m"], 1, d_model_p, f32)
    b2v = pad2(params["b2v"], 1, d_model_p, f32)

    if use_resident:
        grid = (N_p // rt,)
        row_spec = pl.BlockSpec((rt, d_model_p), lambda i: (i, 0))
        w1_spec = pl.BlockSpec((d_model_p, d_ff_p), lambda i: (0, 0),
                               pipeline_mode=pl.Buffered(1))
        b1_spec = pl.BlockSpec((1, d_ff_p), lambda i: (0, 0),
                               pipeline_mode=pl.Buffered(1))
        w2_spec = pl.BlockSpec((d_ff_p, d_model_p), lambda i: (0, 0),
                               pipeline_mode=pl.Buffered(1))
        b2_spec = pl.BlockSpec((1, d_model_p), lambda i: (0, 0),
                               pipeline_mode=pl.Buffered(1))
        kernel = _ffn_kernel_resident
        dims = ("parallel",)
        weight_streams = 1
    else:
        grid = (N_p // rt, d_ff_p // ft)
        row_spec = pl.BlockSpec((rt, d_model_p), lambda i, k: (i, 0))
        w1_spec = pl.BlockSpec((d_model_p, ft), lambda i, k: (0, k))
        b1_spec = pl.BlockSpec((1, ft), lambda i, k: (0, k))
        w2_spec = pl.BlockSpec((ft, d_model_p), lambda i, k: (k, 0))
        b2_spec = pl.BlockSpec((1, d_model_p), lambda i, k: (0, 0),
                               pipeline_mode=pl.Buffered(1))
        kernel = _ffn_kernel_streamed
        dims = ("parallel", "arbitrary")
        weight_streams = N_p // rt  # weights re-streamed once per row tile

    cost = pl.CostEstimate(
        flops=4 * 2 * N_p * d_model_p * d_ff_p,
        transcendentals=N_p * (3 * d_ff_p + 2 * d_model_p),
        bytes_accessed=(2 * N_p * d_model_p * abytes            # mu/var in
                        + 2 * N_p * d_model_p * 4               # both outputs
                        + weight_streams * 4 * d_model_p * d_ff_p * wbytes
                        + bias_bytes))

    mu_out, var_out = pl.pallas_call(
        kernel,
        out_shape=(jax.ShapeDtypeStruct((N_p, d_model_p), f32),
                   jax.ShapeDtypeStruct((N_p, d_model_p), f32)),
        grid_spec=pltpu.PrefetchScalarGridSpec(
            num_scalar_prefetch=0,
            grid=grid,
            in_specs=[row_spec, row_spec,
                      w1_spec, b1_spec, w1_spec, b1_spec,
                      w2_spec, b2_spec, w2_spec, b2_spec],
            out_specs=[row_spec, row_spec],
        ),
        compiler_params=pltpu.CompilerParams(
            dimension_semantics=dims,
            vmem_limit_bytes=vmem_limit),
        cost_estimate=cost,
    )(mu2, var2, w1m, b1m, w1v, b1v, w2m, b2m, w2v, b2v)

    mu_out = mu_out[:N, :d_model].reshape(batch, seq, d_model)
    var_out = var_out[:N, :d_model].reshape(batch, seq, d_model)
    return mu_out, var_out


# ----------------------------------------------------------------------------
# Init + reference + test
# ----------------------------------------------------------------------------
def init_params(key, d_model, d_ff):
    """Deterministic init mimicking nn.Linear (uniform +/- 1/sqrt(fan_in)).
    Weights stored as (in_features, out_features); biases stored as (1, out)."""
    keys = jax.random.split(key, 8)

    def linear(kw, kb, fan_in, fan_out):
        bound = 1.0 / math.sqrt(fan_in)
        w = jax.random.uniform(kw, (fan_in, fan_out), jnp.float32, -bound, bound)
        b = jax.random.uniform(kb, (1, fan_out), jnp.float32, -bound, bound)
        return w, b

    w1m, b1m = linear(keys[0], keys[1], d_model, d_ff)
    w1v, b1v = linear(keys[2], keys[3], d_model, d_ff)
    w2m, b2m = linear(keys[4], keys[5], d_ff, d_model)
    w2v, b2v = linear(keys[6], keys[7], d_ff, d_model)
    return dict(w1m=w1m, b1m=b1m, w1v=w1v, b1v=b1v,
                w2m=w2m, b2m=b2m, w2v=w2v, b2v=b2v)


def reference(mu, var, p, weight_dtype=jnp.bfloat16):
    """Plain-JAX reference matching the kernel's numerics (bf16 MXU inputs,
    f32 accumulation) so the comparison validates the kernel, not rounding."""
    f32 = jnp.float32

    def mm(x, w):
        return jnp.dot(x.astype(weight_dtype).astype(f32),
                       w.astype(weight_dtype).astype(f32),
                       precision=lax.Precision.HIGHEST)

    m1 = jax.nn.gelu(mm(mu, p["w1m"]) + p["b1m"][0], approximate=False)
    v1 = jax.nn.softplus(mm(var, p["w1v"]) + p["b1v"][0])
    m2 = mm(m1, p["w2m"]) + p["b2m"][0]
    v2 = jax.nn.softplus(mm(v1, p["w2v"]) + p["b2v"][0])
    return m2, v2


if __name__ == "__main__":
    batch, seq, d_model, d_ff = 2, 8, 32, 64

    key = jax.random.PRNGKey(0)
    k_mu, k_var, k_params = jax.random.split(key, 3)

    mu = jax.random.normal(k_mu, (batch, seq, d_model), jnp.float32)
    # variances are positive in a GaussianDistribution
    var = jax.nn.softplus(jax.random.normal(k_var, (batch, seq, d_model), jnp.float32))

    params = init_params(k_params, d_model, d_ff)

    mu_out, var_out = dist_feed_forward(mu, var, params)
    jax.block_until_ready((mu_out, var_out))

    mu_ref, var_ref = reference(mu, var, params)
    assert mu_out.shape == (batch, seq, d_model)
    assert var_out.shape == (batch, seq, d_model)
    assert jnp.allclose(mu_out, mu_ref, atol=5e-3, rtol=5e-3), \
        float(jnp.max(jnp.abs(mu_out - mu_ref)))
    assert jnp.allclose(var_out, var_ref, atol=5e-3, rtol=5e-3), \
        float(jnp.max(jnp.abs(var_out - var_ref)))

    print("KERNEL_OK")
</pallas_src>

<mosaic_0001>
module attributes {stable_mosaic.version = 11 : i64} {
  func.func @_ffn_kernel_resident(%arg0: i32, %arg1: memref<16x128xbf16, #tpu.memory_space<vmem>>, %arg2: memref<16x128xbf16, #tpu.memory_space<vmem>>, %arg3: memref<128x128xbf16, #tpu.memory_space<vmem>>, %arg4: memref<1x128xf32, #tpu.memory_space<vmem>>, %arg5: memref<128x128xbf16, #tpu.memory_space<vmem>>, %arg6: memref<1x128xf32, #tpu.memory_space<vmem>>, %arg7: memref<128x128xbf16, #tpu.memory_space<vmem>>, %arg8: memref<1x128xf32, #tpu.memory_space<vmem>>, %arg9: memref<128x128xbf16, #tpu.memory_space<vmem>>, %arg10: memref<1x128xf32, #tpu.memory_space<vmem>>, %arg11: memref<16x128xf32, #tpu.memory_space<vmem>>, %arg12: memref<16x128xf32, #tpu.memory_space<vmem>>) attributes {dimension_semantics = [#tpu.dimension_semantics<parallel>], iteration_bounds = array<i64: 1>, scalar_prefetch = 0 : i64, scratch_operands = 0 : i64, tpu.core_type = #tpu.core_type<tc>, window_params = [{transform_indices = @transform_0, window_bounds = array<i64: 16, 128>}, {transform_indices = @transform_1, window_bounds = array<i64: 16, 128>}, {pipeline_mode = #tpu.pipeline_mode<synchronous>, transform_indices = @transform_2, window_bounds = array<i64: 128, 128>}, {pipeline_mode = #tpu.pipeline_mode<synchronous>, transform_indices = @transform_3, window_bounds = array<i64: 1, 128>}, {pipeline_mode = #tpu.pipeline_mode<synchronous>, transform_indices = @transform_4, window_bounds = array<i64: 128, 128>}, {pipeline_mode = #tpu.pipeline_mode<synchronous>, transform_indices = @transform_5, window_bounds = array<i64: 1, 128>}, {pipeline_mode = #tpu.pipeline_mode<synchronous>, transform_indices = @transform_6, window_bounds = array<i64: 128, 128>}, {pipeline_mode = #tpu.pipeline_mode<synchronous>, transform_indices = @transform_7, window_bounds = array<i64: 1, 128>}, {pipeline_mode = #tpu.pipeline_mode<synchronous>, transform_indices = @transform_8, window_bounds = array<i64: 128, 128>}, {pipeline_mode = #tpu.pipeline_mode<synchronous>, transform_indices = @transform_9, window_bounds = array<i64: 1, 128>}, {transform_indices = @transform_10, window_bounds = array<i64: 16, 128>}, {transform_indices = @transform_11, window_bounds = array<i64: 16, 128>}]} {
    %c0 = arith.constant 0 : index
    %c0_0 = arith.constant 0 : index
    %0 = vector.load %arg1[%c0, %c0_0] : memref<16x128xbf16, #tpu.memory_space<vmem>>, vector<16x128xbf16>
    %c0_1 = arith.constant 0 : index
    %c0_2 = arith.constant 0 : index
    %1 = vector.load %arg3[%c0_1, %c0_2] : memref<128x128xbf16, #tpu.memory_space<vmem>>, vector<128x128xbf16>
    %cst = arith.constant dense<0.000000e+00> : vector<16x128xf32>
    %2 = tpu.matmul %0, %1, %cst {dimension_numbers = #tpu.dot_dimension_numbers<[1], [0], [0], [1], [0, 0, 1, 1], [], []>} : vector<16x128xbf16>, vector<128x128xbf16>, vector<16x128xf32> -> vector<16x128xf32>
    %c0_3 = arith.constant 0 : index
    %c0_4 = arith.constant 0 : index
    %3 = vector.load %arg4[%c0_3, %c0_4] : memref<1x128xf32, #tpu.memory_space<vmem>>, vector<1x128xf32>
    %4 = vector.broadcast %3 : vector<1x128xf32> to vector<16x128xf32>
    %5 = arith.addf %2, %4 : vector<16x128xf32>
    %cst_5 = arith.constant 5.000000e-01 : f32
    %6 = vector.broadcast %cst_5 : f32 to vector<16x128xf32>
    %7 = arith.mulf %6, %5 : vector<16x128xf32>
    %cst_6 = arith.constant 0.707106769 : f32
    %8 = vector.broadcast %cst_6 : f32 to vector<16x128xf32>
    %9 = arith.mulf %5, %8 : vector<16x128xf32>
    %10 = math.erf %9 : vector<16x128xf32>
    %cst_7 = arith.constant 1.000000e+00 : f32
    %11 = vector.broadcast %cst_7 : f32 to vector<16x128xf32>
    %12 = arith.addf %11, %10 : vector<16x128xf32>
    %13 = arith.mulf %7, %12 : vector<16x128xf32>
    %14 = arith.truncf %13 : vector<16x128xf32> to vector<16x128xbf16>
    %c0_8 = arith.constant 0 : index
    %c0_9 = arith.constant 0 : index
    %15 = vector.load %arg7[%c0_8, %c0_9] : memref<128x128xbf16, #tpu.memory_space<vmem>>, vector<128x128xbf16>
    %cst_10 = arith.constant dense<0.000000e+00> : vector<16x128xf32>
    %16 = tpu.matmul %14, %15, %cst_10 {dimension_numbers = #tpu.dot_dimension_numbers<[1], [0], [0], [1], [0, 0, 1, 1], [], []>} : vector<16x128xbf16>, vector<128x128xbf16>, vector<16x128xf32> -> vector<16x128xf32>
    %c0_11 = arith.constant 0 : index
    %c0_12 = arith.constant 0 : index
    %17 = vector.load %arg8[%c0_11, %c0_12] : memref<1x128xf32, #tpu.memory_space<vmem>>, vector<1x128xf32>
    %18 = vector.broadcast %17 : vector<1x128xf32> to vector<16x128xf32>
    %19 = arith.addf %16, %18 : vector<16x128xf32>
    %c0_13 = arith.constant 0 : index
    %c0_14 = arith.constant 0 : index
    %20 = vector.load %arg11[%c0_13, %c0_14] : memref<16x128xf32, #tpu.memory_space<vmem>>, vector<16x128xf32>
    tpu.vector_store %arg11[%c0_13, %c0_14], %19 {strides = array<i32>} : memref<16x128xf32, #tpu.memory_space<vmem>>, vector<16x128xf32>,
    %c0_15 = arith.constant 0 : index
    %c0_16 = arith.constant 0 : index
    %21 = vector.load %arg2[%c0_15, %c0_16] : memref<16x128xbf16, #tpu.memory_space<vmem>>, vector<16x128xbf16>
    %c0_17 = arith.constant 0 : index
    %c0_18 = arith.constant 0 : index
    %22 = vector.load %arg5[%c0_17, %c0_18] : memref<128x128xbf16, #tpu.memory_space<vmem>>, vector<128x128xbf16>
    %cst_19 = arith.constant dense<0.000000e+00> : vector<16x128xf32>
    %23 = tpu.matmul %21, %22, %cst_19 {dimension_numbers = #tpu.dot_dimension_numbers<[1], [0], [0], [1], [0, 0, 1, 1], [], []>} : vector<16x128xbf16>, vector<128x128xbf16>, vector<16x128xf32> -> vector<16x128xf32>
    %c0_20 = arith.constant 0 : index
    %c0_21 = arith.constant 0 : index
    %24 = vector.load %arg6[%c0_20, %c0_21] : memref<1x128xf32, #tpu.memory_space<vmem>>, vector<1x128xf32>
    %25 = vector.broadcast %24 : vector<1x128xf32> to vector<16x128xf32>
    %26 = arith.addf %23, %25 : vector<16x128xf32>
    %cst_22 = arith.constant 0.000000e+00 : f32
    %27 = vector.broadcast %cst_22 : f32 to vector<16x128xf32>
    %28 = arith.maximumf %26, %27 : vector<16x128xf32>
    %29 = math.absf %26 : vector<16x128xf32>
    %cst_23 = arith.constant 0.000000e+00 : f32
    %30 = vector.broadcast %cst_23 : f32 to vector<16x128xf32>
    %31 = arith.subf %30, %29 : vector<16x128xf32>
    %32 = math.exp %31 : vector<16x128xf32>
    %33 = math.log1p %32 : vector<16x128xf32>
    %34 = arith.addf %28, %33 : vector<16x128xf32>
    %35 = arith.truncf %34 : vector<16x128xf32> to vector<16x128xbf16>
    %c0_24 = arith.constant 0 : index
    %c0_25 = arith.constant 0 : index
    %36 = vector.load %arg9[%c0_24, %c0_25] : memref<128x128xbf16, #tpu.memory_space<vmem>>, vector<128x128xbf16>
    %cst_26 = arith.constant dense<0.000000e+00> : vector<16x128xf32>
    %37 = tpu.matmul %35, %36, %cst_26 {dimension_numbers = #tpu.dot_dimension_numbers<[1], [0], [0], [1], [0, 0, 1, 1], [], []>} : vector<16x128xbf16>, vector<128x128xbf16>, vector<16x128xf32> -> vector<16x128xf32>
    %c0_27 = arith.constant 0 : index
    %c0_28 = arith.constant 0 : index
    %38 = vector.load %arg10[%c0_27, %c0_28] : memref<1x128xf32, #tpu.memory_space<vmem>>, vector<1x128xf32>
    %39 = vector.broadcast %38 : vector<1x128xf32> to vector<16x128xf32>
    %40 = arith.addf %37, %39 : vector<16x128xf32>
    %cst_29 = arith.constant 0.000000e+00 : f32
    %41 = vector.broadcast %cst_29 : f32 to vector<16x128xf32>
    %42 = arith.maximumf %40, %41 : vector<16x128xf32>
    %43 = math.absf %40 : vector<16x128xf32>
    %cst_30 = arith.constant 0.000000e+00 : f32
    %44 = vector.broadcast %cst_30 : f32 to vector<16x128xf32>
    %45 = arith.subf %44, %43 : vector<16x128xf32>
    %46 = math.exp %45 : vector<16x128xf32>
    %47 = math.log1p %46 : vector<16x128xf32>
    %48 = arith.addf %42, %47 : vector<16x128xf32>
    %c0_31 = arith.constant 0 : index
    %c0_32 = arith.constant 0 : index
    %49 = vector.load %arg12[%c0_31, %c0_32] : memref<16x128xf32, #tpu.memory_space<vmem>>, vector<16x128xf32>
    tpu.vector_store %arg12[%c0_31, %c0_32], %48 {strides = array<i32>} : memref<16x128xf32, #tpu.memory_space<vmem>>, vector<16x128xf32>,
    return
  }
  func.func @transform_0(%arg0: i32) -> (i32, i32) {
    %c0_i32 = arith.constant 0 : i32
    %c0_i32_0 = arith.constant 0 : i32
    return %arg0, %c0_i32 : i32, i32
  }
  func.func @transform_1(%arg0: i32) -> (i32, i32) {
    %c0_i32 = arith.constant 0 : i32
    %c0_i32_0 = arith.constant 0 : i32
    return %arg0, %c0_i32 : i32, i32
  }
  func.func @transform_2(%arg0: i32) -> (i32, i32) {
    %c0_i32 = arith.constant 0 : i32
    %c0_i32_0 = arith.constant 0 : i32
    %c0_i32_1 = arith.constant 0 : i32
    return %c0_i32, %c0_i32_0 : i32, i32
  }
  func.func @transform_3(%arg0: i32) -> (i32, i32) {
    %c0_i32 = arith.constant 0 : i32
    %c0_i32_0 = arith.constant 0 : i32
    %c0_i32_1 = arith.constant 0 : i32
    return %c0_i32, %c0_i32_0 : i32, i32
  }
  func.func @transform_4(%arg0: i32) -> (i32, i32) {
    %c0_i32 = arith.constant 0 : i32
    %c0_i32_0 = arith.constant 0 : i32
    %c0_i32_1 = arith.constant 0 : i32
    return %c0_i32, %c0_i32_0 : i32, i32
  }
  func.func @transform_5(%arg0: i32) -> (i32, i32) {
    %c0_i32 = arith.constant 0 : i32
    %c0_i32_0 = arith.constant 0 : i32
    %c0_i32_1 = arith.constant 0 : i32
    return %c0_i32, %c0_i32_0 : i32, i32
  }
  func.func @transform_6(%arg0: i32) -> (i32, i32) {
    %c0_i32 = arith.constant 0 : i32
    %c0_i32_0 = arith.constant 0 : i32
    %c0_i32_1 = arith.constant 0 : i32
    return %c0_i32, %c0_i32_0 : i32, i32
  }
  func.func @transform_7(%arg0: i32) -> (i32, i32) {
    %c0_i32 = arith.constant 0 : i32
    %c0_i32_0 = arith.constant 0 : i32
    %c0_i32_1 = arith.constant 0 : i32
    return %c0_i32, %c0_i32_0 : i32, i32
  }
  func.func @transform_8(%arg0: i32) -> (i32, i32) {
    %c0_i32 = arith.constant 0 : i32
    %c0_i32_0 = arith.constant 0 : i32
    %c0_i32_1 = arith.constant 0 : i32
    return %c0_i32, %c0_i32_0 : i32, i32
  }
  func.func @transform_9(%arg0: i32) -> (i32, i32) {
    %c0_i32 = arith.constant 0 : i32
    %c0_i32_0 = arith.constant 0 : i32
    %c0_i32_1 = arith.constant 0 : i32
    return %c0_i32, %c0_i32_0 : i32, i32
  }
  func.func @transform_10(%arg0: i32) -> (i32, i32) {
    %c0_i32 = arith.constant 0 : i32
    %c0_i32_0 = arith.constant 0 : i32
    return %arg0, %c0_i32 : i32, i32
  }
  func.func @transform_11(%arg0: i32) -> (i32, i32) {
    %c0_i32 = arith.constant 0 : i32
    %c0_i32_0 = arith.constant 0 : i32
    return %arg0, %c0_i32 : i32, i32
  }
}

</mosaic_0001>

<llo_original>
// kernel: dist_feed_forward.1
$region0: #{dist_feed_forward.1}
  #allocation0 [shape = 'u32[]', space=smem, size = 0x4, offset = 0x4, fixed_abs, tag = 'smem constant byte address 0x4 - core index']
  #allocation1 [shape = 'u32[144,128]{1,0:T(1,128)}', space=vmem, size = 0x12000, scoped, tag = 'internal scratch']
  %s0 = inlined_call_operand.vmem [shape: bf16[16,128], index: 0, kind: input, shape index: {}]
  %s1 = inlined_call_operand.vmem [shape: bf16[16,128], index: 1, kind: input, shape index: {}]
  %s2 = inlined_call_operand.vmem [shape: bf16[128,128], index: 2, kind: input, shape index: {}]
  %s3 = inlined_call_operand.vmem [shape: f32[1,128], index: 3, kind: input, shape index: {}]
  %s4 = inlined_call_operand.vmem [shape: bf16[128,128], index: 4, kind: input, shape index: {}]
  %s5 = inlined_call_operand.vmem [shape: f32[1,128], index: 5, kind: input, shape index: {}]
  %s6 = inlined_call_operand.vmem [shape: bf16[128,128], index: 6, kind: input, shape index: {}]
  %s7 = inlined_call_operand.vmem [shape: f32[1,128], index: 7, kind: input, shape index: {}]
  %s8 = inlined_call_operand.vmem [shape: bf16[128,128], index: 8, kind: input, shape index: {}]
  %s9 = inlined_call_operand.vmem [shape: f32[1,128], index: 9, kind: input, shape index: {}]
  %s10 = inlined_call_operand.vmem [shape: f32[16,128], index: 10, kind: output, shape index: {0}]
  %s11 = inlined_call_operand.vmem [shape: f32[16,128], index: 11, kind: output, shape index: {1}]
  %12 = xla_tuple %s10, %s11
  %s13 = sld [smem:[#allocation0]]
  $region58: #{dist_feed_forward.1} parent=0
    _
  %s15 = ssub.s32 1, %s13
  %s16 = scalar_select 0, %s15, %s13
  // Predicated region
  $region2: #{dist_feed_forward.1} parent=0 // pred_check
    _
  $region3: #{dist_feed_forward.1} parent=0 // pred_check_branch
    %18 = sbr.rel (0) target = $region5
  $region4: #{dist_feed_forward.1} parent=0 // pred_region
    _
  $region5: #{dist_feed_forward.1} parent=0 // pred_fallthru
    _
  // Predicated region
  $region6: #{dist_feed_forward.1} parent=0 // pred_check
    _
  $region7: #{dist_feed_forward.1} parent=0 // pred_check_branch
    %20 = sbr.rel (0) target = $region9
  $region8: #{dist_feed_forward.1} parent=0 // pred_region
    _
  $region9: #{dist_feed_forward.1} parent=0 // pred_fallthru
    _
  // Predicated region
  $region10: #{dist_feed_forward.1} parent=0 // pred_check
    _
  $region11: #{dist_feed_forward.1} parent=0 // pred_check_branch
    %22 = sbr.rel (0) target = $region13
  $region12: #{dist_feed_forward.1} parent=0 // pred_region
    _
  $region13: #{dist_feed_forward.1} parent=0 // pred_fallthru
    _
  // Predicated region
  $region14: #{dist_feed_forward.1} parent=0 // pred_check
    _
  $region15: #{dist_feed_forward.1} parent=0 // pred_check_branch
    %24 = sbr.rel (0) target = $region17
  $region16: #{dist_feed_forward.1} parent=0 // pred_region
    _
  $region17: #{dist_feed_forward.1} parent=0 // pred_fallthru
    _
  // Predicated region
  $region18: #{dist_feed_forward.1} parent=0 // pred_check
    _
  $region19: #{dist_feed_forward.1} parent=0 // pred_check_branch
    %26 = sbr.rel (0) target = $region21
  $region20: #{dist_feed_forward.1} parent=0 // pred_region
    _
  $region21: #{dist_feed_forward.1} parent=0 // pred_fallthru
    _
  // Predicated region
  $region22: #{dist_feed_forward.1} parent=0 // pred_check
    _
  $region23: #{dist_feed_forward.1} parent=0 // pred_check_branch
    %28 = sbr.rel (0) target = $region25
  $region24: #{dist_feed_forward.1} parent=0 // pred_region
    _
  $region25: #{dist_feed_forward.1} parent=0 // pred_fallthru
    _
  // Predicated region
  $region26: #{dist_feed_forward.1} parent=0 // pred_check
    _
  $region27: #{dist_feed_forward.1} parent=0 // pred_check_branch
    %30 = sbr.rel (0) target = $region29
  $region28: #{dist_feed_forward.1} parent=0 // pred_region
    _
  $region29: #{dist_feed_forward.1} parent=0 // pred_fallthru
    _
  // Predicated region
  $region30: #{dist_feed_forward.1} parent=0 // pred_check
    _
  $region31: #{dist_feed_forward.1} parent=0 // pred_check_branch
    %32 = sbr.rel (0) target = $region33
  $region32: #{dist_feed_forward.1} parent=0 // pred_region
    _
  $region33: #{dist_feed_forward.1} parent=0 // pred_fallthru
    _
  // Predicated region
  $region34: #{dist_feed_forward.1} parent=0 // pred_check
    _
  $region35: #{dist_feed_forward.1} parent=0 // pred_check_branch
    %34 = sbr.rel (0) target = $region37
  $region36: #{dist_feed_forward.1} parent=0 // pred_region
    _
  $region37: #{dist_feed_forward.1} parent=0 // pred_fallthru
    _
  // Predicated region
  $region38: #{dist_feed_forward.1} parent=0 // pred_check
    _
  $region39: #{dist_feed_forward.1} parent=0 // pred_check_branch
    %36 = sbr.rel (0) target = $region41
  $region40: #{dist_feed_forward.1} parent=0 // pred_region
    _
  $region41: #{dist_feed_forward.1} parent=0 // pred_fallthru
    _
  %v38 = vld [vmem:[%s0] sm:$0xf]
  %v39 = vld [vmem:[%s0 + $0x4] sm:$0xf]
  %v40 = vld [vmem:[%s2] sm:$0xf]
  %v41 = vld [vmem:[%s2 + $0x4] sm:$0xf]
  %v42 = vld [vmem:[%s2 + $0x8] sm:$0xf]
  %v43 = vld [vmem:[%s2 + $0xc] sm:$0xf]
  %v44 = vld [vmem:[%s2 + $0x10] sm:$0xf]
  %v45 = vld [vmem:[%s2 + $0x14] sm:$0xf]
  %v46 = vld [vmem:[%s2 + $0x18] sm:$0xf]
  %v47 = vld [vmem:[%s2 + $0x1c] sm:$0xf]
  %v48 = vld [vmem:[%s2 + $0x20] sm:$0xf]
  %v49 = vld [vmem:[%s2 + $0x24] sm:$0xf]
  %v50 = vld [vmem:[%s2 + $0x28] sm:$0xf]
  %v51 = vld [vmem:[%s2 + $0x2c] sm:$0xf]
  %v52 = vld [vmem:[%s2 + $0x30] sm:$0xf]
  %v53 = vld [vmem:[%s2 + $0x34] sm:$0xf]
  %v54 = vld [vmem:[%s2 + $0x38] sm:$0xf]
  %v55 = vld [vmem:[%s2 + $0x3c] sm:$0xf]
  %v56 = vld [vmem:[%s3] sm:$0x1]
  %v58 = vlaneseq
  %v59 = vshrl.u32 %v58, 7
  %v60 = vsub.s32 0, %v59
  %v61 = vrot.slane %v56, %v60
  %v65 = vunpack.c.l.b16 %v38
  %v66 = vunpack.c.l.b16 %v39
  %v67 = vpack.c.b16 %v66, %v65
  %v85 = vunpack.c.l.b16 %v40
  %v86 = vunpack.c.l.b16 %v41
  %v87 = vunpack.c.l.b16 %v42
  %v88 = vunpack.c.l.b16 %v43
  %v89 = vunpack.c.l.b16 %v44
  %v90 = vunpack.c.l.b16 %v45
  %v91 = vunpack.c.l.b16 %v46
  %v92 = vunpack.c.l.b16 %v47
  %v93 = vunpack.c.l.b16 %v48
  %v94 = vunpack.c.l.b16 %v49
  %v95 = vunpack.c.l.b16 %v50
  %v96 = vunpack.c.l.b16 %v51
  %v97 = vunpack.c.l.b16 %v52
  %v98 = vunpack.c.l.b16 %v53
  %v99 = vunpack.c.l.b16 %v54
  %v100 = vunpack.c.l.b16 %v55
  %v101 = vpack.c.b16 %v86, %v85
  %v102 = vpack.c.b16 %v88, %v87
  %v103 = vpack.c.b16 %v90, %v89
  %v104 = vpack.c.b16 %v92, %v91
  %v105 = vpack.c.b16 %v94, %v93
  %v106 = vpack.c.b16 %v96, %v95
  %v107 = vpack.c.b16 %v98, %v97
  %v108 = vpack.c.b16 %v100, %v99
  %117 = vmatprep.subr.bf16.mxu0 0
  %118 = vmatpush1.bf16.msra.mxu0 %v108
  %119 = vmatprep.subr.bf16.mxu0 0
  %120 = vmatpush1.bf16.msra.mxu0 %v107
  %121 = vmatprep.subr.bf16.mxu0 0
  %122 = vmatpush1.bf16.msra.mxu0 %v106
  %123 = vmatprep.subr.bf16.mxu0 0
  %124 = vmatpush1.bf16.msra.mxu0 %v105
  %125 = vmatprep.subr.bf16.mxu0 0
  %126 = vmatpush1.bf16.msra.mxu0 %v104
  %127 = vmatprep.subr.bf16.mxu0 0
  %128 = vmatpush1.bf16.msra.mxu0 %v103
  %129 = vmatprep.subr.bf16.mxu0 0
  %130 = vmatpush1.bf16.msra.mxu0 %v102
  %131 = vmatprep.subr.bf16.mxu0 0
  %132 = vmatpush1.bf16.msra.mxu0 %v101
  %133 = vmatprep.subr.bf16.mxu0 0
  %134 = vmatpush2.bf16.msra.mxu0 0
  %135 = vmatprep.subr.bf16.mxu0 0
  %136 = vmatpush2.bf16.msra.mxu0 0
  %137 = vmatprep.subr.bf16.mxu0 0
  %138 = vmatpush2.bf16.msra.mxu0 0
  %139 = vmatprep.subr.bf16.mxu0 0
  %140 = vmatpush2.bf16.msra.mxu0 0
  %141 = vmatprep.subr.bf16.mxu0 0
  %142 = vmatpush2.bf16.msra.mxu0 0
  %143 = vmatprep.subr.bf16.mxu0 0
  %144 = vmatpush2.bf16.msra.mxu0 0
  %145 = vmatprep.subr.bf16.mxu0 0
  %146 = vmatpush2.bf16.msra.mxu0 0
  %147 = vmatprep.subr.bf16.mxu0 0
  %148 = vmatpush2.bf16.msra.mxu0 0
  %149 = vmatprep.mubr.bf16.mxu0 0
  %150 = vmatmul.mubr.bf16.gmra.mxu0 %v67
  %v151 = vpop.f32.mrf.mxu0
  %v152 = vadd.f32 %v61, %v151
  %v153 = vpop.f32.mrf.mxu0
  %v154 = vpop.f32.mrf.mxu0
  %v155 = vadd.f32 %v61, %v154
  %v156 = vpop.f32.mrf.mxu0
  %157 = vdwg.mxu0
  %v158 = vmul.f32 %v152, 0.5
  %v159 = vmul.f32 %v155, 0.5
  %v160 = vmul.f32 %v152, 0.70710677
  %v161 = vmul.f32 %v155, 0.70710677
  %v162 = verf.f32.pop %v160
  %v163 = verf.f32.pop %v161
  %v164 = vadd.f32 %v162, 1.0
  %v165 = vadd.f32 %v163, 1.0
  %v166 = vmul.f32 %v158, %v164
  %v167 = vmul.f32 %v159, %v165
  %v168 = vpack.c.bf16 %v167, %v166
  %v169 = vld [vmem:[%s6] sm:$0xf]
  %v170 = vld [vmem:[%s6 + $0x4] sm:$0xf]
  %v171 = vld [vmem:[%s6 + $0x8] sm:$0xf]
  %v172 = vld [vmem:[%s6 + $0xc] sm:$0xf]
  %v173 = vld [vmem:[%s6 + $0x10] sm:$0xf]
  %v174 = vld [vmem:[%s6 + $0x14] sm:$0xf]
  %v175 = vld [vmem:[%s6 + $0x18] sm:$0xf]
  %v176 = vld [vmem:[%s6 + $0x1c] sm:$0xf]
  %v177 = vld [vmem:[%s6 + $0x20] sm:$0xf]
  %v178 = vld [vmem:[%s6 + $0x24] sm:$0xf]
  %v179 = vld [vmem:[%s6 + $0x28] sm:$0xf]
  %v180 = vld [vmem:[%s6 + $0x2c] sm:$0xf]
  %v181 = vld [vmem:[%s6 + $0x30] sm:$0xf]
  %v182 = vld [vmem:[%s6 + $0x34] sm:$0xf]
  %v183 = vld [vmem:[%s6 + $0x38] sm:$0xf]
  %v184 = vld [vmem:[%s6 + $0x3c] sm:$0xf]
  %v185 = vld [vmem:[%s7] sm:$0x1]
  %v187 = vlaneseq
  %v188 = vshrl.u32 %v187, 7
  %v189 = vsub.s32 0, %v188
  %v190 = vrot.slane %v185, %v189
  %v208 = vunpack.c.l.b16 %v169
  %v209 = vunpack.c.l.b16 %v170
  %v210 = vunpack.c.l.b16 %v171
  %v211 = vunpack.c.l.b16 %v172
  %v212 = vunpack.c.l.b16 %v173
  %v213 = vunpack.c.l.b16 %v174
  %v214 = vunpack.c.l.b16 %v175
  %v215 = vunpack.c.l.b16 %v176
  %v216 = vunpack.c.l.b16 %v177
  %v217 = vunpack.c.l.b16 %v178
  %v218 = vunpack.c.l.b16 %v179
  %v219 = vunpack.c.l.b16 %v180
  %v220 = vunpack.c.l.b16 %v181
  %v221 = vunpack.c.l.b16 %v182
  %v222 = vunpack.c.l.b16 %v183
  %v223 = vunpack.c.l.b16 %v184
  %v224 = vpack.c.b16 %v209, %v208
  %v225 = vpack.c.b16 %v211, %v210
  %v226 = vpack.c.b16 %v213, %v212
  %v227 = vpack.c.b16 %v215, %v214
  %v228 = vpack.c.b16 %v217, %v216
  %v229 = vpack.c.b16 %v219, %v218
  %v230 = vpack.c.b16 %v221, %v220
  %v231 = vpack.c.b16 %v223, %v222
  %240 = vmatprep.subr.bf16.mxu0 0
  %241 = vmatpush1.bf16.msra.mxu0 %v231
  %242 = vmatprep.subr.bf16.mxu0 0
  %243 = vmatpush1.bf16.msra.mxu0 %v230
  %244 = vmatprep.subr.bf16.mxu0 0
  %245 = vmatpush1.bf16.msra.mxu0 %v229
  %246 = vmatprep.subr.bf16.mxu0 0
  %247 = vmatpush1.bf16.msra.mxu0 %v228
  %248 = vmatprep.subr.bf16.mxu0 0
  %249 = vmatpush1.bf16.msra.mxu0 %v227
  %250 = vmatprep.subr.bf16.mxu0 0
  %251 = vmatpush1.bf16.msra.mxu0 %v226
  %252 = vmatprep.subr.bf16.mxu0 0
  %253 = vmatpush1.bf16.msra.mxu0 %v225
  %254 = vmatprep.subr.bf16.mxu0 0
  %255 = vmatpush1.bf16.msra.mxu0 %v224
  %256 = vmatprep.subr.bf16.mxu0 0
  %257 = vmatpush2.bf16.msra.mxu0 0
  %258 = vmatprep.subr.bf16.mxu0 0
  %259 = vmatpush2.bf16.msra.mxu0 0
  %260 = vmatprep.subr.bf16.mxu0 0
  %261 = vmatpush2.bf16.msra.mxu0 0
  %262 = vmatprep.subr.bf16.mxu0 0
  %263 = vmatpush2.bf16.msra.mxu0 0
  %264 = vmatprep.subr.bf16.mxu0 0
  %265 = vmatpush2.bf16.msra.mxu0 0
  %266 = vmatprep.subr.bf16.mxu0 0
  %267 = vmatpush2.bf16.msra.mxu0 0
  %268 = vmatprep.subr.bf16.mxu0 0
  %269 = vmatpush2.bf16.msra.mxu0 0
  %270 = vmatprep.subr.bf16.mxu0 0
  %271 = vmatpush2.bf16.msra.mxu0 0
  %272 = vmatprep.mubr.bf16.mxu0 0
  %273 = vmatmul.mubr.bf16.gmra.mxu0 %v168
  %v274 = vpop.f32.mrf.mxu0
  %v275 = vadd.f32 %v190, %v274
  %v276 = vpop.f32.mrf.mxu0
  %v277 = vpop.f32.mrf.mxu0
  %v278 = vadd.f32 %v190, %v277
  %v279 = vpop.f32.mrf.mxu0
  %280 = vdwg.mxu0
  %281 = vst [vmem:[%s10] sm:$0xff] %v275
  %282 = vst [vmem:[%s10 + $0x8] sm:$0xff] %v278
  %v283 = vld [vmem:[%s1] sm:$0xf]
  %v284 = vld [vmem:[%s1 + $0x4] sm:$0xf]
  %v285 = vld [vmem:[%s4] sm:$0xf]
  %v286 = vld [vmem:[%s4 + $0x4] sm:$0xf]
  %v287 = vld [vmem:[%s4 + $0x8] sm:$0xf]
  %v288 = vld [vmem:[%s4 + $0xc] sm:$0xf]
  %v289 = vld [vmem:[%s4 + $0x10] sm:$0xf]
  %v290 = vld [vmem:[%s4 + $0x14] sm:$0xf]
  %v291 = vld [vmem:[%s4 + $0x18] sm:$0xf]
  %v292 = vld [vmem:[%s4 + $0x1c] sm:$0xf]
  %v293 = vld [vmem:[%s4 + $0x20] sm:$0xf]
  %v294 = vld [vmem:[%s4 + $0x24] sm:$0xf]
  %v295 = vld [vmem:[%s4 + $0x28] sm:$0xf]
  %v296 = vld [vmem:[%s4 + $0x2c] sm:$0xf]
  %v297 = vld [vmem:[%s4 + $0x30] sm:$0xf]
  %v298 = vld [vmem:[%s4 + $0x34] sm:$0xf]
  %v299 = vld [vmem:[%s4 + $0x38] sm:$0xf]
  %v300 = vld [vmem:[%s4 + $0x3c] sm:$0xf]
  %v301 = vld [vmem:[%s5] sm:$0x1]
  %v303 = vlaneseq
  %v304 = vshrl.u32 %v303, 7
  %v305 = vsub.s32 0, %v304
  %v306 = vrot.slane %v301, %v305
  %v310 = vunpack.c.l.b16 %v283
  %v311 = vunpack.c.l.b16 %v284
  %v312 = vpack.c.b16 %v311, %v310
  %v330 = vunpack.c.l.b16 %v285
  %v331 = vunpack.c.l.b16 %v286
  %v332 = vunpack.c.l.b16 %v287
  %v333 = vunpack.c.l.b16 %v288
  %v334 = vunpack.c.l.b16 %v289
  %v335 = vunpack.c.l.b16 %v290
  %v336 = vunpack.c.l.b16 %v291
  %v337 = vunpack.c.l.b16 %v292
  %v338 = vunpack.c.l.b16 %v293
  %v339 = vunpack.c.l.b16 %v294
  %v340 = vunpack.c.l.b16 %v295
  %v341 = vunpack.c.l.b16 %v296
  %v342 = vunpack.c.l.b16 %v297
  %v343 = vunpack.c.l.b16 %v298
  %v344 = vunpack.c.l.b16 %v299
  %v345 = vunpack.c.l.b16 %v300
  %v346 = vpack.c.b16 %v331, %v330
  %v347 = vpack.c.b16 %v333, %v332
  %v348 = vpack.c.b16 %v335, %v334
  %v349 = vpack.c.b16 %v337, %v336
  %v350 = vpack.c.b16 %v339, %v338
  %v351 = vpack.c.b16 %v341, %v340
  %v352 = vpack.c.b16 %v343, %v342
  %v353 = vpack.c.b16 %v345, %v344
  %362 = vmatprep.subr.bf16.mxu0 0
  %363 = vmatpush1.bf16.msra.mxu0 %v353
  %364 = vmatprep.subr.bf16.mxu0 0
  %365 = vmatpush1.bf16.msra.mxu0 %v352
  %366 = vmatprep.subr.bf16.mxu0 0
  %367 = vmatpush1.bf16.msra.mxu0 %v351
  %368 = vmatprep.subr.bf16.mxu0 0
  %369 = vmatpush1.bf16.msra.mxu0 %v350
  %370 = vmatprep.subr.bf16.mxu0 0
  %371 = vmatpush1.bf16.msra.mxu0 %v349
  %372 = vmatprep.subr.bf16.mxu0 0
  %373 = vmatpush1.bf16.msra.mxu0 %v348
  %374 = vmatprep.subr.bf16.mxu0 0
  %375 = vmatpush1.bf16.msra.mxu0 %v347
  %376 = vmatprep.subr.bf16.mxu0 0
  %377 = vmatpush1.bf16.msra.mxu0 %v346
  %378 = vmatprep.subr.bf16.mxu0 0
  %379 = vmatpush2.bf16.msra.mxu0 0
  %380 = vmatprep.subr.bf16.mxu0 0
  %381 = vmatpush2.bf16.msra.mxu0 0
  %382 = vmatprep.subr.bf16.mxu0 0
  %383 = vmatpush2.bf16.msra.mxu0 0
  %384 = vmatprep.subr.bf16.mxu0 0
  %385 = vmatpush2.bf16.msra.mxu0 0
  %386 = vmatprep.subr.bf16.mxu0 0
  %387 = vmatpush2.bf16.msra.mxu0 0
  %388 = vmatprep.subr.bf16.mxu0 0
  %389 = vmatpush2.bf16.msra.mxu0 0
  %390 = vmatprep.subr.bf16.mxu0 0
  %391 = vmatpush2.bf16.msra.mxu0 0
  %392 = vmatprep.subr.bf16.mxu0 0
  %393 = vmatpush2.bf16.msra.mxu0 0
  %394 = vmatprep.mubr.bf16.mxu0 0
  %395 = vmatmul.mubr.bf16.gmra.mxu0 %v312
  %v396 = vpop.f32.mrf.mxu0
  %v397 = vadd.f32 %v306, %v396
  %v398 = vpop.f32.mrf.mxu0
  %v399 = vpop.f32.mrf.mxu0
  %v400 = vadd.f32 %v306, %v399
  %v401 = vpop.f32.mrf.mxu0
  %402 = vdwg.mxu0
  %v403 = vmax.f32 %v397, 0.0
  %v404 = vmax.f32 %v400, 0.0
  %v405 = vand.u32 2147483647, %v397
  %v406 = vand.u32 2147483647, %v400
  %v407 = vsub.f32 0.0, %v405
  %v408 = vsub.f32 0.0, %v406
  %v409 = vmul.f32 %v407, 1.442695
  %v410 = vpow.pop %v409
  %v411 = vmul.f32 %v408, 1.442695
  %v412 = vpow.pop %v411
  %v413 = vadd.f32 %v410, 1.0
  %v414 = vlog2.pop %v413
  %v415 = vmul.f32 %v414, 0.6931472
  %v416 = vmul.f32 -0.5, %v410
  %v417 = vadd.f32 %v416, 1.0
  %v418 = vmul.f32 %v417, %v410
  %v419 = vand.u32 2147483647, %v410
  %vm420 = vcmp.lt.f32.partialorder %v419, 0.0004427343
  %v421 = vsel %vm420, %v418, %v415
  %v422 = vadd.f32 %v412, 1.0
  %v423 = vlog2.pop %v422
  %v424 = vmul.f32 %v423, 0.6931472
  %v425 = vmul.f32 -0.5, %v412
  %v426 = vadd.f32 %v425, 1.0
  %v427 = vmul.f32 %v426, %v412
  %v428 = vand.u32 2147483647, %v412
  %vm429 = vcmp.lt.f32.partialorder %v428, 0.0004427343
  %v430 = vsel %vm429, %v427, %v424
  %v431 = vadd.f32 %v403, %v421
  %v432 = vadd.f32 %v404, %v430
  %v433 = vpack.c.bf16 %v432, %v431
  %v434 = vld [vmem:[%s8] sm:$0xf]
  %v435 = vld [vmem:[%s8 + $0x4] sm:$0xf]
  %v436 = vld [vmem:[%s8 + $0x8] sm:$0xf]
  %v437 = vld [vmem:[%s8 + $0xc] sm:$0xf]
  %v438 = vld [vmem:[%s8 + $0x10] sm:$0xf]
  %v439 = vld [vmem:[%s8 + $0x14] sm:$0xf]
  %v440 = vld [vmem:[%s8 + $0x18] sm:$0xf]
  %v441 = vld [vmem:[%s8 + $0x1c] sm:$0xf]
  %v442 = vld [vmem:[%s8 + $0x20] sm:$0xf]
  %v443 = vld [vmem:[%s8 + $0x24] sm:$0xf]
  %v444 = vld [vmem:[%s8 + $0x28] sm:$0xf]
  %v445 = vld [vmem:[%s8 + $0x2c] sm:$0xf]
  %v446 = vld [vmem:[%s8 + $0x30] sm:$0xf]
  %v447 = vld [vmem:[%s8 + $0x34] sm:$0xf]
  %v448 = vld [vmem:[%s8 + $0x38] sm:$0xf]
  %v449 = vld [vmem:[%s8 + $0x3c] sm:$0xf]
  %v450 = vld [vmem:[%s9] sm:$0x1]
  %v452 = vlaneseq
  %v453 = vshrl.u32 %v452, 7
  %v454 = vsub.s32 0, %v453
  %v455 = vrot.slane %v450, %v454
  %v473 = vunpack.c.l.b16 %v434
  %v474 = vunpack.c.l.b16 %v435
  %v475 = vunpack.c.l.b16 %v436
  %v476 = vunpack.c.l.b16 %v437
  %v477 = vunpack.c.l.b16 %v438
  %v478 = vunpack.c.l.b16 %v439
  %v479 = vunpack.c.l.b16 %v440
  %v480 = vunpack.c.l.b16 %v441
  %v481 = vunpack.c.l.b16 %v442
  %v482 = vunpack.c.l.b16 %v443
  %v483 = vunpack.c.l.b16 %v444
  %v484 = vunpack.c.l.b16 %v445
  %v485 = vunpack.c.l.b16 %v446
  %v486 = vunpack.c.l.b16 %v447
  %v487 = vunpack.c.l.b16 %v448
  %v488 = vunpack.c.l.b16 %v449
  %v489 = vpack.c.b16 %v474, %v473
  %v490 = vpack.c.b16 %v476, %v475
  %v491 = vpack.c.b16 %v478, %v477
  %v492 = vpack.c.b16 %v480, %v479
  %v493 = vpack.c.b16 %v482, %v481
  %v494 = vpack.c.b16 %v484, %v483
  %v495 = vpack.c.b16 %v486, %v485
  %v496 = vpack.c.b16 %v488, %v487
  %505 = vmatprep.subr.bf16.mxu0 0
  %506 = vmatpush1.bf16.msra.mxu0 %v496
  %507 = vmatprep.subr.bf16.mxu0 0
  %508 = vmatpush1.bf16.msra.mxu0 %v495
  %509 = vmatprep.subr.bf16.mxu0 0
  %510 = vmatpush1.bf16.msra.mxu0 %v494
  %511 = vmatprep.subr.bf16.mxu0 0
  %512 = vmatpush1.bf16.msra.mxu0 %v493
  %513 = vmatprep.subr.bf16.mxu0 0
  %514 = vmatpush1.bf16.msra.mxu0 %v492
  %515 = vmatprep.subr.bf16.mxu0 0
  %516 = vmatpush1.bf16.msra.mxu0 %v491
  %517 = vmatprep.subr.bf16.mxu0 0
  %518 = vmatpush1.bf16.msra.mxu0 %v490
  %519 = vmatprep.subr.bf16.mxu0 0
  %520 = vmatpush1.bf16.msra.mxu0 %v489
  %521 = vmatprep.subr.bf16.mxu0 0
  %522 = vmatpush2.bf16.msra.mxu0 0
  %523 = vmatprep.subr.bf16.mxu0 0
  %524 = vmatpush2.bf16.msra.mxu0 0
  %525 = vmatprep.subr.bf16.mxu0 0
  %526 = vmatpush2.bf16.msra.mxu0 0
  %527 = vmatprep.subr.bf16.mxu0 0
  %528 = vmatpush2.bf16.msra.mxu0 0
  %529 = vmatprep.subr.bf16.mxu0 0
  %530 = vmatpush2.bf16.msra.mxu0 0
  %531 = vmatprep.subr.bf16.mxu0 0
  %532 = vmatpush2.bf16.msra.mxu0 0
  %533 = vmatprep.subr.bf16.mxu0 0
  %534 = vmatpush2.bf16.msra.mxu0 0
  %535 = vmatprep.subr.bf16.mxu0 0
  %536 = vmatpush2.bf16.msra.mxu0 0
  %537 = vmatprep.mubr.bf16.mxu0 0
  %538 = vmatmul.mubr.bf16.gmra.mxu0 %v433
  %v539 = vpop.f32.mrf.mxu0
  %v540 = vadd.f32 %v455, %v539
  %v541 = vpop.f32.mrf.mxu0
  %v542 = vpop.f32.mrf.mxu0
  %v543 = vadd.f32 %v455, %v542
  %v544 = vpop.f32.mrf.mxu0
  %545 = vdwg.mxu0
  %v546 = vmax.f32 %v540, 0.0
  %v547 = vmax.f32 %v543, 0.0
  %v548 = vand.u32 2147483647, %v540
  %v549 = vand.u32 2147483647, %v543
  %v550 = vsub.f32 0.0, %v548
  %v551 = vsub.f32 0.0, %v549
  %v552 = vmul.f32 %v550, 1.442695
  %v553 = vpow.pop %v552
  %v554 = vmul.f32 %v551, 1.442695
  %v555 = vpow.pop %v554
  %v556 = vadd.f32 %v553, 1.0
  %v557 = vlog2.pop %v556
  %v558 = vmul.f32 %v557, 0.6931472
  %v559 = vmul.f32 -0.5, %v553
  %v560 = vadd.f32 %v559, 1.0
  %v561 = vmul.f32 %v560, %v553
  %v562 = vand.u32 2147483647, %v553
  %vm563 = vcmp.lt.f32.partialorder %v562, 0.0004427343
  %v564 = vsel %vm563, %v561, %v558
  %v565 = vadd.f32 %v555, 1.0
  %v566 = vlog2.pop %v565
  %v567 = vmul.f32 %v566, 0.6931472
  %v568 = vmul.f32 -0.5, %v555
  %v569 = vadd.f32 %v568, 1.0
  %v570 = vmul.f32 %v569, %v555
  %v571 = vand.u32 2147483647, %v555
  %vm572 = vcmp.lt.f32.partialorder %v571, 0.0004427343
  %v573 = vsel %vm572, %v570, %v567
  %v574 = vadd.f32 %v546, %v564
  %v575 = vadd.f32 %v547, %v573
  %576 = vst [vmem:[%s11] sm:$0xff] %v574
  %577 = vst [vmem:[%s11 + $0x8] sm:$0xff] %v575
  // Predicated region
  $region42: #{dist_feed_forward.1} parent=0 // pred_check
    _
  $region43: #{dist_feed_forward.1} parent=0 // pred_check_branch
    %579 = sbr.rel (0) target = $region45
  $region44: #{dist_feed_forward.1} parent=0 // pred_region
    _
  $region45: #{dist_feed_forward.1} parent=0 // pred_fallthru
    _
  // Predicated region
  $region46: #{dist_feed_forward.1} parent=0 // pred_check
    _
  $region47: #{dist_feed_forward.1} parent=0 // pred_check_branch
    %581 = sbr.rel (0) target = $region49
  $region48: #{dist_feed_forward.1} parent=0 // pred_region
    _
  $region49: #{dist_feed_forward.1} parent=0 // pred_fallthru
    _
  // Predicated region
  $region50: #{dist_feed_forward.1} parent=0 // pred_check
    _
  $region51: #{dist_feed_forward.1} parent=0 // pred_check_branch
    %583 = sbr.rel (0) target = $region53
  $region52: #{dist_feed_forward.1} parent=0 // pred_region
    _
  $region53: #{dist_feed_forward.1} parent=0 // pred_fallthru
    _
  // Predicated region
  $region54: #{dist_feed_forward.1} parent=0 // pred_check
    _
  $region55: #{dist_feed_forward.1} parent=0 // pred_check_branch
    %585 = sbr.rel (0) target = $region57
  $region56: #{dist_feed_forward.1} parent=0 // pred_region
    _
  $region57: #{dist_feed_forward.1} parent=0 // pred_fallthru
    _

</llo_original>
